<compile_context>
chip_gen: v7x
topology: tpu7x:2x2x1
jax: 0.10.0
libtpu: 0.0.40
codegen_flags: <defaults>
</compile_context>

<pallas_src>
import functools

import jax
import jax.numpy as jnp
from jax.experimental import pallas as pl
from jax.experimental.pallas import tpu as pltpu


# ---------------------------------------------------------------------------
# Capability probes (done once; keep the kernel robust across jax builds)
# ---------------------------------------------------------------------------
def _probe_buffered_support():
    try:
        pl.BlockSpec((8, 128), lambda i, j: (0, 0), pipeline_mode=pl.Buffered(1))
        return True
    except Exception:
        return False


_HAS_BUFFERED = _probe_buffered_support()


def _tpu_vmem_capacity_bytes():
    try:
        return int(pltpu.get_tpu_info().vmem_capacity_bytes)
    except Exception:
        return 64 * 2**20          # conservative default (v7x per-TensorCore VMEM)


# ---------------------------------------------------------------------------
# Pallas kernel: im2col into a VMEM scratch, one K = 9*C MXU matmul (f32 acc)
# ---------------------------------------------------------------------------
def _downsample_kernel(p00, p01, p10, p11, p20, p21, w_ref, b_ref, o_ref,
                       patches, *, tile_ho, wo, c):
    # p{kh}{pw}: (tile_ho, Wo+1, C) plane block, value = xpad[2i+kh, 2j+pw, :]
    # w_ref:     (9*C, Cout)  tap-major folded conv weight
    # b_ref:     (1, Cout)    f32 bias
    # patches:   (tile_ho*Wo, 9*C) VMEM scratch (im2col lives only in VMEM)
    # o_ref:     (tile_ho*Wo, Cout)
    rows = tile_ho * wo
    planes = ((p00, p01), (p10, p11), (p20, p21))
    for kh in range(3):
        for kw in range(3):
            pw, dw = kw % 2, kw // 2
            tap = planes[kh][pw][:, dw:dw + wo, :]                 # (tile_ho, Wo, C)
            t = kh * 3 + kw
            patches[:, t * c:(t + 1) * c] = tap.reshape(rows, c)
    acc = jnp.dot(patches[...], w_ref[...], preferred_element_type=jnp.float32)
    o_ref[...] = (acc + b_ref[...]).astype(o_ref.dtype)


# ---------------------------------------------------------------------------
# Tiling heuristics (generation-aware)
# ---------------------------------------------------------------------------
def _vmem_usage(tile_ho, wo, c, cout, in_b, out_b, w_bufs):
    rows = tile_ho * wo
    return (12 * tile_ho * (wo + 1) * c * in_b                # 6 plane blocks, double-buffered
            + 2 * rows * cout * out_b                         # output block, double-buffered
            + w_bufs * 9 * c * cout * in_b + 2 * cout * 4     # weight + bias
            + rows * 9 * c * in_b                             # im2col VMEM scratch
            + rows * cout * 4 + rows * c * in_b)              # f32 dot result + tap temp


def _pick_tile_ho(n, ho, wo, c, cout, in_b, out_b, w_bufs, target_rows, budget):
    t = max(1, min(ho, -(-target_rows // max(wo, 1))))
    if n == 1 and ho >= 2:      # keep >= 2 row blocks so both v7x TensorCores get work
        t = min(t, -(-ho // 2))
    while t > 1 and _vmem_usage(t, wo, c, cout, in_b, out_b, w_bufs) > budget:
        t = max(1, t - max(1, t // 4))
    return t


# ---------------------------------------------------------------------------
# DownSample forward (NCHW in / NCHW out, matching the PyTorch module)
# ---------------------------------------------------------------------------
def downsample_forward(x_nchw, weight, bias, *, tile_ho=None,
                       compute_dtype=jnp.bfloat16):
    """Conv2d(C, C, 3, stride=2, padding=1).

    x_nchw: (N, C, H, W); weight: (Cout, C, 3, 3); bias: (Cout,).
    compute_dtype is an explicit accuracy knob: plane/weight dtype fed to the
    MXU (bf16 default; accumulation and bias add are always f32).  Use
    jnp.float32 for exact parity with the f32 PyTorch module.
    """
    N, C, H, W = x_nchw.shape
    Cout, Cin, KH, KW = weight.shape
    assert (Cin, KH, KW) == (C, 3, 3)
    Ho = (H - 1) // 2 + 1
    Wo = (W - 1) // 2 + 1
    out_dtype = x_nchw.dtype
    in_b = jnp.dtype(compute_dtype).itemsize
    out_b = jnp.dtype(out_dtype).itemsize
    w_bufs = 1 if _HAS_BUFFERED else 2

    vmem_cap = _tpu_vmem_capacity_bytes()
    big_vmem = vmem_cap >= 96 * 2**20              # v5e / v6e: 128 MiB; v7x: 64 MiB
    target_rows = 2048 if big_vmem else 1024
    budget = (40 if big_vmem else 22) * 2**20

    if tile_ho is None:
        tile_ho = _pick_tile_ho(N, Ho, Wo, C, Cout, in_b, out_b, w_bufs,
                                target_rows, budget)
    tile_ho = max(1, min(int(tile_ho), Ho))
    NB = -(-Ho // tile_ho)
    L = NB * tile_ho
    rows = tile_ho * Wo

    # NCHW -> NHWC; pad top/left by 1 (conv padding) and bottom/right by just
    # enough that every stride-2 plane slice below is in bounds (extra zero
    # rows only feed ragged-tail output rows, which are dropped afterwards).
    x = jnp.transpose(x_nchw.astype(compute_dtype), (0, 2, 3, 1))
    pad_b = 2 * L + 1 - (H + 1)
    pad_r = 2 * (Wo + 1) - (W + 1)
    xp = jnp.pad(x, ((0, 0), (1, pad_b), (1, pad_r), (0, 0)))

    # Six planes (N, L, Wo+1, C): plane[kh,pw][n,i,j,:] = xp[n, 2i+kh, 2j+pw, :].
    # Kernel rows (kh) are fully resolved, so output-row tiles map onto disjoint
    # plane-row blocks: plain BlockSpec streaming, no gather, no halo windows.
    planes = [xp[:, kh:kh + 2 * L - 1:2, pw:pw + 2 * (Wo + 1) - 1:2, :]
              for kh in range(3) for pw in range(2)]

    # Weight (Cout, Cin, kh, kw) -> (kh, kw, Cin, Cout) -> (9*Cin, Cout); bias f32 row.
    w_mat = jnp.transpose(weight, (2, 3, 1, 0)).reshape(9 * C, Cout).astype(compute_dtype)
    b_row = bias.reshape(1, Cout).astype(jnp.float32)

    plane_spec = pl.BlockSpec((None, tile_ho, Wo + 1, C), lambda n, b: (n, b, 0, 0))

    def const_spec(block_shape):
        idx = lambda n, b: (0,) * len(block_shape)
        if _HAS_BUFFERED:
            try:
                return pl.BlockSpec(block_shape, idx, pipeline_mode=pl.Buffered(1))
            except Exception:
                pass
        return pl.BlockSpec(block_shape, idx)

    w_spec = const_spec((9 * C, Cout))
    b_spec = const_spec((1, Cout))

    vmem_need = _vmem_usage(tile_ho, Wo, C, Cout, in_b, out_b, w_bufs)
    vmem_ceiling = (96 if big_vmem else 38) * 2**20
    vmem_floor = (32 if big_vmem else 24) * 2**20
    vmem_limit = int(min(vmem_ceiling, max(vmem_floor, (3 * vmem_need) // 2)))

    flops = 2 * N * NB * rows * (9 * C) * Cout
    bytes_accessed = int(6 * N * L * (Wo + 1) * C * in_b
                         + 9 * C * Cout * in_b + Cout * 4
                         + N * NB * rows * Cout * out_b)

    out_blocks = pl.pallas_call(
        functools.partial(_downsample_kernel, tile_ho=tile_ho, wo=Wo, c=C),
        out_shape=jax.ShapeDtypeStruct((N, NB, rows, Cout), out_dtype),
        grid_spec=pltpu.PrefetchScalarGridSpec(
            num_scalar_prefetch=0,
            grid=(N, NB),
            in_specs=[plane_spec] * 6 + [w_spec, b_spec],
            out_specs=pl.BlockSpec((None, None, rows, Cout),
                                   lambda n, b: (n, b, 0, 0)),
            scratch_shapes=[pltpu.VMEM((rows, 9 * C), compute_dtype)],
        ),
        compiler_params=pltpu.CompilerParams(
            dimension_semantics=("parallel", "parallel"),
            vmem_limit_bytes=vmem_limit),
        cost_estimate=pl.CostEstimate(flops=flops, transcendentals=0,
                                      bytes_accessed=bytes_accessed),
    )(*planes, w_mat, b_row)

    # (N, NB, tile_ho*Wo, Cout) -> (N, Ho, Wo, Cout) (drop ragged tail) -> NCHW.
    out = out_blocks.reshape(N, NB * tile_ho, Wo, Cout)[:, :Ho]
    return jnp.transpose(out, (0, 3, 1, 2))


# ---------------------------------------------------------------------------
# Deterministic parameter init (matches torch xavier_uniform_ / zeros_)
# ---------------------------------------------------------------------------
def init_params(key, in_ch):
    fan_in = in_ch * 9
    fan_out = in_ch * 9          # Cout == Cin for DownSample
    bound = (6.0 / (fan_in + fan_out)) ** 0.5
    weight = jax.random.uniform(key, (in_ch, in_ch, 3, 3),
                                minval=-bound, maxval=bound, dtype=jnp.float32)
    bias = jnp.zeros((in_ch,), dtype=jnp.float32)
    return weight, bias


if __name__ == "__main__":
    key = jax.random.PRNGKey(0)
    k_x, k_w = jax.random.split(key)

    N, C, H, W = 2, 4, 16, 16
    x = jax.random.normal(k_x, (N, C, H, W), dtype=jnp.float32)
    weight, bias = init_params(k_w, C)

    def conv_ref(xx, ww, bb):
        y = jax.lax.conv_general_dilated(
            xx, ww, window_strides=(2, 2), padding=((1, 1), (1, 1)),
            dimension_numbers=("NCHW", "OIHW", "NCHW"))
        return y + bb.reshape(1, -1, 1, 1)

    # Default bf16-MXU path (f32 accumulation) vs conv on bf16-rounded operands.
    out = jax.block_until_ready(jax.jit(downsample_forward)(x, weight, bias))
    assert out.shape == (N, C, H // 2, W // 2), out.shape
    ref_bf16 = conv_ref(x.astype(jnp.bfloat16).astype(jnp.float32),
                        weight.astype(jnp.bfloat16).astype(jnp.float32), bias)
    assert jnp.allclose(out, ref_bf16, atol=5e-2, rtol=5e-2), (
        float(jnp.max(jnp.abs(out - ref_bf16))))

    # f32 compute-dtype path vs the exact conv (only summation-order / MXU-pass
    # differences remain).
    out_f32 = jax.block_until_ready(
        jax.jit(functools.partial(downsample_forward,
                                  compute_dtype=jnp.float32))(x, weight, bias))
    ref_f32 = conv_ref(x, weight, bias)
    assert jnp.allclose(out_f32, ref_f32, atol=5e-3, rtol=5e-3), (
        float(jnp.max(jnp.abs(out_f32 - ref_f32))))

    print("KERNEL_OK")
</pallas_src>

<mosaic_0001>
module attributes {stable_mosaic.version = 11 : i64} {
  func.func @_downsample_kernel(%arg0: i32, %arg1: i32, %arg2: memref<1x8x9x4xbf16, #tpu.memory_space<vmem>>, %arg3: memref<1x8x9x4xbf16, #tpu.memory_space<vmem>>, %arg4: memref<1x8x9x4xbf16, #tpu.memory_space<vmem>>, %arg5: memref<1x8x9x4xbf16, #tpu.memory_space<vmem>>, %arg6: memref<1x8x9x4xbf16, #tpu.memory_space<vmem>>, %arg7: memref<1x8x9x4xbf16, #tpu.memory_space<vmem>>, %arg8: memref<36x4xbf16, #tpu.memory_space<vmem>>, %arg9: memref<1x4xf32, #tpu.memory_space<vmem>>, %arg10: memref<1x1x64x4xf32, #tpu.memory_space<vmem>>, %arg11: memref<64x36xbf16, #tpu.memory_space<vmem>>) attributes {dimension_semantics = [#tpu.dimension_semantics<parallel>, #tpu.dimension_semantics<parallel>], iteration_bounds = array<i64: 2, 1>, scalar_prefetch = 0 : i64, scratch_operands = 1 : i64, tpu.core_type = #tpu.core_type<tc>, window_params = [{transform_indices = @transform_0, window_bounds = array<i64: 1, 8, 9, 4>}, {transform_indices = @transform_1, window_bounds = array<i64: 1, 8, 9, 4>}, {transform_indices = @transform_2, window_bounds = array<i64: 1, 8, 9, 4>}, {transform_indices = @transform_3, window_bounds = array<i64: 1, 8, 9, 4>}, {transform_indices = @transform_4, window_bounds = array<i64: 1, 8, 9, 4>}, {transform_indices = @transform_5, window_bounds = array<i64: 1, 8, 9, 4>}, {pipeline_mode = #tpu.pipeline_mode<synchronous>, transform_indices = @transform_6, window_bounds = array<i64: 36, 4>}, {pipeline_mode = #tpu.pipeline_mode<synchronous>, transform_indices = @transform_7, window_bounds = array<i64: 1, 4>}, {transform_indices = @transform_8, window_bounds = array<i64: 1, 1, 64, 4>}]} {
    %c0 = arith.constant 0 : index
    %c0_0 = arith.constant 0 : index
    %c0_1 = arith.constant 0 : index
    %c0_2 = arith.constant 0 : index
    %0 = vector.load %arg2[%c0, %c0_0, %c0_1, %c0_2] : memref<1x8x9x4xbf16, #tpu.memory_space<vmem>>, vector<1x8x8x4xbf16>
    %1 = vector.shape_cast %0 : vector<1x8x8x4xbf16> to vector<8x8x4xbf16>
    %2 = vector.shape_cast %1 : vector<8x8x4xbf16> to vector<64x4xbf16>
    %c0_3 = arith.constant 0 : index
    %c0_4 = arith.constant 0 : index
    %3 = vector.load %arg11[%c0_3, %c0_4] : memref<64x36xbf16, #tpu.memory_space<vmem>>, vector<64x4xbf16>
    tpu.vector_store %arg11[%c0_3, %c0_4], %2 {strides = array<i32>} : memref<64x36xbf16, #tpu.memory_space<vmem>>, vector<64x4xbf16>,
    %c0_5 = arith.constant 0 : index
    %c0_6 = arith.constant 0 : index
    %c0_7 = arith.constant 0 : index
    %c0_8 = arith.constant 0 : index
    %4 = vector.load %arg3[%c0_5, %c0_6, %c0_7, %c0_8] : memref<1x8x9x4xbf16, #tpu.memory_space<vmem>>, vector<1x8x8x4xbf16>
    %5 = vector.shape_cast %4 : vector<1x8x8x4xbf16> to vector<8x8x4xbf16>
    %6 = vector.shape_cast %5 : vector<8x8x4xbf16> to vector<64x4xbf16>
    %c0_9 = arith.constant 0 : index
    %c4 = arith.constant 4 : index
    %7 = vector.load %arg11[%c0_9, %c4] : memref<64x36xbf16, #tpu.memory_space<vmem>>, vector<64x4xbf16>
    tpu.vector_store %arg11[%c0_9, %c4], %6 {strides = array<i32>} : memref<64x36xbf16, #tpu.memory_space<vmem>>, vector<64x4xbf16>,
    %c0_10 = arith.constant 0 : index
    %c0_11 = arith.constant 0 : index
    %c1 = arith.constant 1 : index
    %c0_12 = arith.constant 0 : index
    %8 = vector.load %arg2[%c0_10, %c0_11, %c1, %c0_12] : memref<1x8x9x4xbf16, #tpu.memory_space<vmem>>, vector<1x8x8x4xbf16>
    %9 = vector.shape_cast %8 : vector<1x8x8x4xbf16> to vector<8x8x4xbf16>
    %10 = vector.shape_cast %9 : vector<8x8x4xbf16> to vector<64x4xbf16>
    %c0_13 = arith.constant 0 : index
    %c8 = arith.constant 8 : index
    %11 = vector.load %arg11[%c0_13, %c8] : memref<64x36xbf16, #tpu.memory_space<vmem>>, vector<64x4xbf16>
    tpu.vector_store %arg11[%c0_13, %c8], %10 {strides = array<i32>} : memref<64x36xbf16, #tpu.memory_space<vmem>>, vector<64x4xbf16>,
    %c0_14 = arith.constant 0 : index
    %c0_15 = arith.constant 0 : index
    %c0_16 = arith.constant 0 : index
    %c0_17 = arith.constant 0 : index
    %12 = vector.load %arg4[%c0_14, %c0_15, %c0_16, %c0_17] : memref<1x8x9x4xbf16, #tpu.memory_space<vmem>>, vector<1x8x8x4xbf16>
    %13 = vector.shape_cast %12 : vector<1x8x8x4xbf16> to vector<8x8x4xbf16>
    %14 = vector.shape_cast %13 : vector<8x8x4xbf16> to vector<64x4xbf16>
    %c0_18 = arith.constant 0 : index
    %c12 = arith.constant 12 : index
    %15 = vector.load %arg11[%c0_18, %c12] : memref<64x36xbf16, #tpu.memory_space<vmem>>, vector<64x4xbf16>
    tpu.vector_store %arg11[%c0_18, %c12], %14 {strides = array<i32>} : memref<64x36xbf16, #tpu.memory_space<vmem>>, vector<64x4xbf16>,
    %c0_19 = arith.constant 0 : index
    %c0_20 = arith.constant 0 : index
    %c0_21 = arith.constant 0 : index
    %c0_22 = arith.constant 0 : index
    %16 = vector.load %arg5[%c0_19, %c0_20, %c0_21, %c0_22] : memref<1x8x9x4xbf16, #tpu.memory_space<vmem>>, vector<1x8x8x4xbf16>
    %17 = vector.shape_cast %16 : vector<1x8x8x4xbf16> to vector<8x8x4xbf16>
    %18 = vector.shape_cast %17 : vector<8x8x4xbf16> to vector<64x4xbf16>
    %c0_23 = arith.constant 0 : index
    %c16 = arith.constant 16 : index
    %19 = vector.load %arg11[%c0_23, %c16] : memref<64x36xbf16, #tpu.memory_space<vmem>>, vector<64x4xbf16>
    tpu.vector_store %arg11[%c0_23, %c16], %18 {strides = array<i32>} : memref<64x36xbf16, #tpu.memory_space<vmem>>, vector<64x4xbf16>,
    %c0_24 = arith.constant 0 : index
    %c0_25 = arith.constant 0 : index
    %c1_26 = arith.constant 1 : index
    %c0_27 = arith.constant 0 : index
    %20 = vector.load %arg4[%c0_24, %c0_25, %c1_26, %c0_27] : memref<1x8x9x4xbf16, #tpu.memory_space<vmem>>, vector<1x8x8x4xbf16>
    %21 = vector.shape_cast %20 : vector<1x8x8x4xbf16> to vector<8x8x4xbf16>
    %22 = vector.shape_cast %21 : vector<8x8x4xbf16> to vector<64x4xbf16>
    %c0_28 = arith.constant 0 : index
    %c20 = arith.constant 20 : index
    %23 = vector.load %arg11[%c0_28, %c20] : memref<64x36xbf16, #tpu.memory_space<vmem>>, vector<64x4xbf16>
    tpu.vector_store %arg11[%c0_28, %c20], %22 {strides = array<i32>} : memref<64x36xbf16, #tpu.memory_space<vmem>>, vector<64x4xbf16>,
    %c0_29 = arith.constant 0 : index
    %c0_30 = arith.constant 0 : index
    %c0_31 = arith.constant 0 : index
    %c0_32 = arith.constant 0 : index
    %24 = vector.load %arg6[%c0_29, %c0_30, %c0_31, %c0_32] : memref<1x8x9x4xbf16, #tpu.memory_space<vmem>>, vector<1x8x8x4xbf16>
    %25 = vector.shape_cast %24 : vector<1x8x8x4xbf16> to vector<8x8x4xbf16>
    %26 = vector.shape_cast %25 : vector<8x8x4xbf16> to vector<64x4xbf16>
    %c0_33 = arith.constant 0 : index
    %c24 = arith.constant 24 : index
    %27 = vector.load %arg11[%c0_33, %c24] : memref<64x36xbf16, #tpu.memory_space<vmem>>, vector<64x4xbf16>
    tpu.vector_store %arg11[%c0_33, %c24], %26 {strides = array<i32>} : memref<64x36xbf16, #tpu.memory_space<vmem>>, vector<64x4xbf16>,
    %c0_34 = arith.constant 0 : index
    %c0_35 = arith.constant 0 : index
    %c0_36 = arith.constant 0 : index
    %c0_37 = arith.constant 0 : index
    %28 = vector.load %arg7[%c0_34, %c0_35, %c0_36, %c0_37] : memref<1x8x9x4xbf16, #tpu.memory_space<vmem>>, vector<1x8x8x4xbf16>
    %29 = vector.shape_cast %28 : vector<1x8x8x4xbf16> to vector<8x8x4xbf16>
    %30 = vector.shape_cast %29 : vector<8x8x4xbf16> to vector<64x4xbf16>
    %c0_38 = arith.constant 0 : index
    %c28 = arith.constant 28 : index
    %31 = vector.load %arg11[%c0_38, %c28] : memref<64x36xbf16, #tpu.memory_space<vmem>>, vector<64x4xbf16>
    tpu.vector_store %arg11[%c0_38, %c28], %30 {strides = array<i32>} : memref<64x36xbf16, #tpu.memory_space<vmem>>, vector<64x4xbf16>,
    %c0_39 = arith.constant 0 : index
    %c0_40 = arith.constant 0 : index
    %c1_41 = arith.constant 1 : index
    %c0_42 = arith.constant 0 : index
    %32 = vector.load %arg6[%c0_39, %c0_40, %c1_41, %c0_42] : memref<1x8x9x4xbf16, #tpu.memory_space<vmem>>, vector<1x8x8x4xbf16>
    %33 = vector.shape_cast %32 : vector<1x8x8x4xbf16> to vector<8x8x4xbf16>
    %34 = vector.shape_cast %33 : vector<8x8x4xbf16> to vector<64x4xbf16>
    %c0_43 = arith.constant 0 : index
    %c32 = arith.constant 32 : index
    %35 = vector.load %arg11[%c0_43, %c32] : memref<64x36xbf16, #tpu.memory_space<vmem>>, vector<64x4xbf16>
    tpu.vector_store %arg11[%c0_43, %c32], %34 {strides = array<i32>} : memref<64x36xbf16, #tpu.memory_space<vmem>>, vector<64x4xbf16>,
    %c0_44 = arith.constant 0 : index
    %c0_45 = arith.constant 0 : index
    %36 = vector.load %arg11[%c0_44, %c0_45] : memref<64x36xbf16, #tpu.memory_space<vmem>>, vector<64x36xbf16>
    %c0_46 = arith.constant 0 : index
    %c0_47 = arith.constant 0 : index
    %37 = vector.load %arg8[%c0_46, %c0_47] : memref<36x4xbf16, #tpu.memory_space<vmem>>, vector<36x4xbf16>
    %cst = arith.constant dense<0.000000e+00> : vector<64x4xf32>
    %38 = tpu.matmul %36, %37, %cst {dimension_numbers = #tpu.dot_dimension_numbers<[1], [0], [0], [1], [0, 0, 1, 1], [], []>} : vector<64x36xbf16>, vector<36x4xbf16>, vector<64x4xf32> -> vector<64x4xf32>
    %c0_48 = arith.constant 0 : index
    %c0_49 = arith.constant 0 : index
    %39 = vector.load %arg9[%c0_48, %c0_49] : memref<1x4xf32, #tpu.memory_space<vmem>>, vector<1x4xf32>
    %40 = vector.broadcast %39 : vector<1x4xf32> to vector<64x4xf32>
    %41 = arith.addf %38, %40 : vector<64x4xf32>
    %c0_50 = arith.constant 0 : index
    %c0_51 = arith.constant 0 : index
    %c0_52 = arith.constant 0 : index
    %c0_53 = arith.constant 0 : index
    %42 = vector.load %arg10[%c0_50, %c0_51, %c0_52, %c0_53] : memref<1x1x64x4xf32, #tpu.memory_space<vmem>>, vector<1x1x64x4xf32>
    %43 = vector.shape_cast %42 : vector<1x1x64x4xf32> to vector<64x4xf32>
    %44 = vector.shape_cast %41 : vector<64x4xf32> to vector<1x1x64x4xf32>
    tpu.vector_store %arg10[%c0_50, %c0_51, %c0_52, %c0_53], %44 {strides = array<i32>} : memref<1x1x64x4xf32, #tpu.memory_space<vmem>>, vector<1x1x64x4xf32>,
    return
  }
  func.func @transform_0(%arg0: i32, %arg1: i32) -> (i32, i32, i32, i32) {
    %c0_i32 = arith.constant 0 : i32
    %c0_i32_0 = arith.constant 0 : i32
    %c0_i32_1 = arith.constant 0 : i32
    return %arg0, %arg1, %c0_i32, %c0_i32_0 : i32, i32, i32, i32
  }
  func.func @transform_1(%arg0: i32, %arg1: i32) -> (i32, i32, i32, i32) {
    %c0_i32 = arith.constant 0 : i32
    %c0_i32_0 = arith.constant 0 : i32
    %c0_i32_1 = arith.constant 0 : i32
    return %arg0, %arg1, %c0_i32, %c0_i32_0 : i32, i32, i32, i32
  }
  func.func @transform_2(%arg0: i32, %arg1: i32) -> (i32, i32, i32, i32) {
    %c0_i32 = arith.constant 0 : i32
    %c0_i32_0 = arith.constant 0 : i32
    %c0_i32_1 = arith.constant 0 : i32
    return %arg0, %arg1, %c0_i32, %c0_i32_0 : i32, i32, i32, i32
  }
  func.func @transform_3(%arg0: i32, %arg1: i32) -> (i32, i32, i32, i32) {
    %c0_i32 = arith.constant 0 : i32
    %c0_i32_0 = arith.constant 0 : i32
    %c0_i32_1 = arith.constant 0 : i32
    return %arg0, %arg1, %c0_i32, %c0_i32_0 : i32, i32, i32, i32
  }
  func.func @transform_4(%arg0: i32, %arg1: i32) -> (i32, i32, i32, i32) {
    %c0_i32 = arith.constant 0 : i32
    %c0_i32_0 = arith.constant 0 : i32
    %c0_i32_1 = arith.constant 0 : i32
    return %arg0, %arg1, %c0_i32, %c0_i32_0 : i32, i32, i32, i32
  }
  func.func @transform_5(%arg0: i32, %arg1: i32) -> (i32, i32, i32, i32) {
    %c0_i32 = arith.constant 0 : i32
    %c0_i32_0 = arith.constant 0 : i32
    %c0_i32_1 = arith.constant 0 : i32
    return %arg0, %arg1, %c0_i32, %c0_i32_0 : i32, i32, i32, i32
  }
  func.func @transform_6(%arg0: i32, %arg1: i32) -> (i32, i32) {
    %c0_i32 = arith.constant 0 : i32
    %c0_i32_0 = arith.constant 0 : i32
    %c0_i32_1 = arith.constant 0 : i32
    return %c0_i32, %c0_i32_0 : i32, i32
  }
  func.func @transform_7(%arg0: i32, %arg1: i32) -> (i32, i32) {
    %c0_i32 = arith.constant 0 : i32
    %c0_i32_0 = arith.constant 0 : i32
    %c0_i32_1 = arith.constant 0 : i32
    return %c0_i32, %c0_i32_0 : i32, i32
  }
  func.func @transform_8(%arg0: i32, %arg1: i32) -> (i32, i32, i32, i32) {
    %c0_i32 = arith.constant 0 : i32
    %c0_i32_0 = arith.constant 0 : i32
    %c0_i32_1 = arith.constant 0 : i32
    return %arg0, %arg1, %c0_i32, %c0_i32_0 : i32, i32, i32, i32
  }
}

</mosaic_0001>

<llo_original>
// kernel: downsample_forward.1
$region0: #{downsample_forward.1}
  #allocation0 [shape = 'u32[]', space=smem, size = 0x4, offset = 0x4, fixed_abs, tag = 'smem constant byte address 0x4 - core index']
  #allocation1 [shape = 'u32[144,128]{1,0:T(1,128)}', space=vmem, size = 0x12000, scoped, tag = 'internal scratch']
  #allocation2 [shape = 'bf16[64,36]{1,0:T(16,128)(2,1)}', space=vmem, size = 0x4000, scoped, tag = 'scratch operand']
  %s0 = inlined_call_operand.vmem [shape: bf16[2,8,9,4], index: 0, kind: input, shape index: {}]
  %s1 = inlined_call_operand.vmem [shape: bf16[2,8,9,4], index: 1, kind: input, shape index: {}]
  %s2 = inlined_call_operand.vmem [shape: bf16[2,8,9,4], index: 2, kind: input, shape index: {}]
  %s3 = inlined_call_operand.vmem [shape: bf16[2,8,9,4], index: 3, kind: input, shape index: {}]
  %s4 = inlined_call_operand.vmem [shape: bf16[2,8,9,4], index: 4, kind: input, shape index: {}]
  %s5 = inlined_call_operand.vmem [shape: bf16[2,8,9,4], index: 5, kind: input, shape index: {}]
  %s6 = inlined_call_operand.vmem [shape: bf16[36,4], index: 6, kind: input, shape index: {}]
  %s7 = inlined_call_operand.vmem [shape: f32[1,4], index: 7, kind: input, shape index: {}]
  %s8 = inlined_call_operand.vmem [shape: f32[2,1,64,4], index: 8, kind: output, shape index: {}]
  %s9 = sld [smem:[#allocation0]]
  $region65: #{downsample_forward.1} parent=0
    _
  %s11 = ssub.s32 1, %s9
  %s12 = scalar_select 0, %s11, %s9
  loop: start=0, step=1, limit=4
  $region2: #{downsample_forward.1} parent=0 // loop_pre_header
    _
  $region3: #{downsample_forward.1} parent=0 // loop_header
    %s14 = sphi 0, %s18
    %p15 = scmp.ge.s32.totalorder %s14, 4
    %s21 = sphi 0, %s33
    %s22 = sphi 0, %s29
    %s23 = sphi 0, %s21
    %s24 = sphi 0, %s22
    %s25 = sphi 0, %s23
    %s26 = sphi 0, %s24
    %s38 = sphi 0, %s40
    %s41 = sphi 0, %s38
    %s42 = sphi 0, %s41
    %s58 = sphi 0, %s42
    %s66 = sphi 0, %s68
    %s69 = sphi 0, %s66
    %s70 = sphi 0, %s69
    %s86 = sphi 0, %s70
    %s94 = sphi 0, %s96
    %s97 = sphi 0, %s94
    %s98 = sphi 0, %s97
    %s114 = sphi 0, %s98
    %s122 = sphi 0, %s124
    %s125 = sphi 0, %s122
    %s126 = sphi 0, %s125
    %s142 = sphi 0, %s126
    %s150 = sphi 0, %s152
    %s153 = sphi 0, %s150
    %s154 = sphi 0, %s153
    %s170 = sphi 0, %s154
    %s178 = sphi 0, %s180
    %s181 = sphi 0, %s178
    %s182 = sphi 0, %s181
    %s198 = sphi 0, %s182
    %s202 = sphi 0, %s202
    %s204 = sphi 0, %s202
    %s205 = sphi 0, %s204
    %s219 = sphi 0, %s205
    %s223 = sphi 0, %s223
    %s225 = sphi 0, %s223
    %s226 = sphi 0, %s225
    %s240 = sphi 0, %s226
    %s248 = sphi 0, %s250
    %s251 = sphi 0, %s248
    %s252 = sphi 0, %s251
    %s268 = sphi 0, %s252
  $region4: #{downsample_forward.1} parent=0 // loop_header_branch
    %17 = sbr.rel (%p15) target = $region8
  $region5: #{downsample_forward.1} parent=0 // loop_body
    %s19 = ssub.s32 %s14, 1
    %s20 = ssub.s32 %s14, 2
    %s27 = sadd.s32 1, %s22
    %p28 = scmp.ge.s32.totalorder %s27, 1
    %s29 = scalar_select %p28, 0, %s27
    %s30 = sadd.s32 1, %s21
    %s31 = scalar_select %p28, %s30, %s21
    %p32 = scmp.ge.s32.totalorder %s31, 2
    %s33 = scalar_select %p32, 0, %s31
    %s34 = ssub.s32 %s21, %s33
    %s35 = ssub.s32 %s22, %s29
    %s36 = sor.u32 %s34, %s35
    %p37 = scmp.eq.s32.totalorder %s36, 0
    %s39 = sadd.s32 %s38, 1
    %s40 = scalar_select %p37, %s38, %s39
    %p43 = pneg %p37
    %p44 = scmp.eq.s32.totalorder %s14, 1
    %p45 = por %p43, %p44
    %p46 = scmp.ne.s32.totalorder %s38, %s41
    %p47 = scmp.eq.s32.totalorder %s14, 0
    %p48 = por %p46, %p47
    %p49 = scmp.ne.s32.totalorder %s38, %s41
    %p50 = scmp.eq.s32.totalorder %s19, 1
    %p51 = por %p49, %p50
    %p52 = scmp.ne.s32.totalorder %s41, %s42
    %p53 = scmp.eq.s32.totalorder %s19, 0
    %p54 = por %p52, %p53
    %p55 = scmp.ne.s32.totalorder %s41, %s42
    %p56 = scmp.eq.s32.totalorder %s20, 1
    %p57 = por %p55, %p56
    %p59 = scmp.ne.s32.totalorder %s42, %s58
    %p60 = scmp.eq.s32.totalorder %s20, 0
    %p61 = por %p59, %p60
    %s62 = ssub.s32 %s21, %s33
    %s63 = ssub.s32 %s22, %s29
    %s64 = sor.u32 %s62, %s63
    %p65 = scmp.eq.s32.totalorder %s64, 0
    %s67 = sadd.s32 %s66, 1
    %s68 = scalar_select %p65, %s66, %s67
    %p71 = pneg %p65
    %p72 = scmp.eq.s32.totalorder %s14, 1
    %p73 = por %p71, %p72
    %p74 = scmp.ne.s32.totalorder %s66, %s69
    %p75 = scmp.eq.s32.totalorder %s14, 0
    %p76 = por %p74, %p75
    %p77 = scmp.ne.s32.totalorder %s66, %s69
    %p78 = scmp.eq.s32.totalorder %s19, 1
    %p79 = por %p77, %p78
    %p80 = scmp.ne.s32.totalorder %s69, %s70
    %p81 = scmp.eq.s32.totalorder %s19, 0
    %p82 = por %p80, %p81
    %p83 = scmp.ne.s32.totalorder %s69, %s70
    %p84 = scmp.eq.s32.totalorder %s20, 1
    %p85 = por %p83, %p84
    %p87 = scmp.ne.s32.totalorder %s70, %s86
    %p88 = scmp.eq.s32.totalorder %s20, 0
    %p89 = por %p87, %p88
    %s90 = ssub.s32 %s21, %s33
    %s91 = ssub.s32 %s22, %s29
    %s92 = sor.u32 %s90, %s91
    %p93 = scmp.eq.s32.totalorder %s92, 0
    %s95 = sadd.s32 %s94, 1
    %s96 = scalar_select %p93, %s94, %s95
    %p99 = pneg %p93
    %p100 = scmp.eq.s32.totalorder %s14, 1
    %p101 = por %p99, %p100
    %p102 = scmp.ne.s32.totalorder %s94, %s97
    %p103 = scmp.eq.s32.totalorder %s14, 0
    %p104 = por %p102, %p103
    %p105 = scmp.ne.s32.totalorder %s94, %s97
    %p106 = scmp.eq.s32.totalorder %s19, 1
    %p107 = por %p105, %p106
    %p108 = scmp.ne.s32.totalorder %s97, %s98
    %p109 = scmp.eq.s32.totalorder %s19, 0
    %p110 = por %p108, %p109
    %p111 = scmp.ne.s32.totalorder %s97, %s98
    %p112 = scmp.eq.s32.totalorder %s20, 1
    %p113 = por %p111, %p112
    %p115 = scmp.ne.s32.totalorder %s98, %s114
    %p116 = scmp.eq.s32.totalorder %s20, 0
    %p117 = por %p115, %p116
    %s118 = ssub.s32 %s21, %s33
    %s119 = ssub.s32 %s22, %s29
    %s120 = sor.u32 %s118, %s119
    %p121 = scmp.eq.s32.totalorder %s120, 0
    %s123 = sadd.s32 %s122, 1
    %s124 = scalar_select %p121, %s122, %s123
    %p127 = pneg %p121
    %p128 = scmp.eq.s32.totalorder %s14, 1
    %p129 = por %p127, %p128
    %p130 = scmp.ne.s32.totalorder %s122, %s125
    %p131 = scmp.eq.s32.totalorder %s14, 0
    %p132 = por %p130, %p131
    %p133 = scmp.ne.s32.totalorder %s122, %s125
    %p134 = scmp.eq.s32.totalorder %s19, 1
    %p135 = por %p133, %p134
    %p136 = scmp.ne.s32.totalorder %s125, %s126
    %p137 = scmp.eq.s32.totalorder %s19, 0
    %p138 = por %p136, %p137
    %p139 = scmp.ne.s32.totalorder %s125, %s126
    %p140 = scmp.eq.s32.totalorder %s20, 1
    %p141 = por %p139, %p140
    %p143 = scmp.ne.s32.totalorder %s126, %s142
    %p144 = scmp.eq.s32.totalorder %s20, 0
    %p145 = por %p143, %p144
    %s146 = ssub.s32 %s21, %s33
    %s147 = ssub.s32 %s22, %s29
    %s148 = sor.u32 %s146, %s147
    %p149 = scmp.eq.s32.totalorder %s148, 0
    %s151 = sadd.s32 %s150, 1
    %s152 = scalar_select %p149, %s150, %s151
    %p155 = pneg %p149
    %p156 = scmp.eq.s32.totalorder %s14, 1
    %p157 = por %p155, %p156
    %p158 = scmp.ne.s32.totalorder %s150, %s153
    %p159 = scmp.eq.s32.totalorder %s14, 0
    %p160 = por %p158, %p159
    %p161 = scmp.ne.s32.totalorder %s150, %s153
    %p162 = scmp.eq.s32.totalorder %s19, 1
    %p163 = por %p161, %p162
    %p164 = scmp.ne.s32.totalorder %s153, %s154
    %p165 = scmp.eq.s32.totalorder %s19, 0
    %p166 = por %p164, %p165
    %p167 = scmp.ne.s32.totalorder %s153, %s154
    %p168 = scmp.eq.s32.totalorder %s20, 1
    %p169 = por %p167, %p168
    %p171 = scmp.ne.s32.totalorder %s154, %s170
    %p172 = scmp.eq.s32.totalorder %s20, 0
    %p173 = por %p171, %p172
    %s174 = ssub.s32 %s21, %s33
    %s175 = ssub.s32 %s22, %s29
    %s176 = sor.u32 %s174, %s175
    %p177 = scmp.eq.s32.totalorder %s176, 0
    %s179 = sadd.s32 %s178, 1
    %s180 = scalar_select %p177, %s178, %s179
    %p183 = pneg %p177
    %p184 = scmp.eq.s32.totalorder %s14, 1
    %p185 = por %p183, %p184
    %p186 = scmp.ne.s32.totalorder %s178, %s181
    %p187 = scmp.eq.s32.totalorder %s14, 0
    %p188 = por %p186, %p187
    %p189 = scmp.ne.s32.totalorder %s178, %s181
    %p190 = scmp.eq.s32.totalorder %s19, 1
    %p191 = por %p189, %p190
    %p192 = scmp.ne.s32.totalorder %s181, %s182
    %p193 = scmp.eq.s32.totalorder %s19, 0
    %p194 = por %p192, %p193
    %p195 = scmp.ne.s32.totalorder %s181, %s182
    %p196 = scmp.eq.s32.totalorder %s20, 1
    %p197 = por %p195, %p196
    %p199 = scmp.ne.s32.totalorder %s182, %s198
    %p200 = scmp.eq.s32.totalorder %s20, 0
    %p201 = por %p199, %p200
    %s203 = sadd.s32 %s202, 1
    %p206 = scmp.eq.s32.totalorder %s14, 1
    %p207 = scmp.ne.s32.totalorder %s202, %s204
    %p208 = scmp.eq.s32.totalorder %s14, 0
    %p209 = por %p207, %p208
    %p210 = scmp.ne.s32.totalorder %s202, %s204
    %p211 = scmp.eq.s32.totalorder %s19, 1
    %p212 = por %p210, %p211
    %p213 = scmp.ne.s32.totalorder %s204, %s205
    %p214 = scmp.eq.s32.totalorder %s19, 0
    %p215 = por %p213, %p214
    %p216 = scmp.ne.s32.totalorder %s204, %s205
    %p217 = scmp.eq.s32.totalorder %s20, 1
    %p218 = por %p216, %p217
    %p220 = scmp.ne.s32.totalorder %s205, %s219
    %p221 = scmp.eq.s32.totalorder %s20, 0
    %p222 = por %p220, %p221
    %s224 = sadd.s32 %s223, 1
    %p227 = scmp.eq.s32.totalorder %s14, 1
    %p228 = scmp.ne.s32.totalorder %s223, %s225
    %p229 = scmp.eq.s32.totalorder %s14, 0
    %p230 = por %p228, %p229
    %p231 = scmp.ne.s32.totalorder %s223, %s225
    %p232 = scmp.eq.s32.totalorder %s19, 1
    %p233 = por %p231, %p232
    %p234 = scmp.ne.s32.totalorder %s225, %s226
    %p235 = scmp.eq.s32.totalorder %s19, 0
    %p236 = por %p234, %p235
    %p237 = scmp.ne.s32.totalorder %s225, %s226
    %p238 = scmp.eq.s32.totalorder %s20, 1
    %p239 = por %p237, %p238
    %p241 = scmp.ne.s32.totalorder %s226, %s240
    %p242 = scmp.eq.s32.totalorder %s20, 0
    %p243 = por %p241, %p242
    %s244 = ssub.s32 %s21, %s33
    %s245 = ssub.s32 %s22, %s29
    %s246 = sor.u32 %s244, %s245
    %p247 = scmp.eq.s32.totalorder %s246, 0
    %s249 = sadd.s32 %s248, 1
    %s250 = scalar_select %p247, %s248, %s249
    %p253 = pneg %p247
    %p254 = scmp.eq.s32.totalorder %s14, 1
    %p255 = por %p253, %p254
    %p256 = scmp.ne.s32.totalorder %s248, %s251
    %p257 = scmp.eq.s32.totalorder %s14, 0
    %p258 = por %p256, %p257
    %p259 = scmp.ne.s32.totalorder %s248, %s251
    %p260 = scmp.eq.s32.totalorder %s19, 1
    %p261 = por %p259, %p260
    %p262 = scmp.ne.s32.totalorder %s251, %s252
    %p263 = scmp.eq.s32.totalorder %s19, 0
    %p264 = por %p262, %p263
    %p265 = scmp.ne.s32.totalorder %s251, %s252
    %p266 = scmp.eq.s32.totalorder %s20, 1
    %p267 = por %p265, %p266
    %p269 = scmp.ne.s32.totalorder %s252, %s268
    %p270 = scmp.eq.s32.totalorder %s20, 0
    %p271 = por %p269, %p270
    %p272 = scmp.le.s32.totalorder 1, %s14
    %p273 = scmp.lt.s32.totalorder %s14, 3
    %p274 = pnand %p272, %p273
    %p275 = pneg %p274
    // Predicated region
    $region9: #{downsample_forward.1} parent=5 // pred_check
      _
    $region10: #{downsample_forward.1} parent=5 // pred_check_branch
      %277 = sbr.rel (%p274) target = $region12
    $region11: #{downsample_forward.1} parent=5 // pred_region
      %s278 = ssub.s32 %s14, 1
      // Predicated region
      $region13: #{downsample_forward.1} parent=11 // pred_check
        %p279 = pneg %p215
      $region14: #{downsample_forward.1} parent=11 // pred_check_branch
        %281 = sbr.rel (%p279) target = $region16
      $region15: #{downsample_forward.1} parent=11 // pred_region
        _
      $region16: #{downsample_forward.1} parent=11 // pred_fallthru
        _
      // Predicated region
      $region17: #{downsample_forward.1} parent=11 // pred_check
        %p282 = pneg %p236
      $region18: #{downsample_forward.1} parent=11 // pred_check_branch
        %284 = sbr.rel (%p282) target = $region20
      $region19: #{downsample_forward.1} parent=11 // pred_region
        _
      $region20: #{downsample_forward.1} parent=11 // pred_fallthru
        _
    $region12: #{downsample_forward.1} parent=5 // pred_fallthru
      _
    %p285 = scmp.lt.s32.totalorder %s14, 2
    // Predicated region
    $region21: #{downsample_forward.1} parent=5 // pred_check
      %p286 = pneg %p285
    $region22: #{downsample_forward.1} parent=5 // pred_check_branch
      %288 = sbr.rel (%p286) target = $region24
    $region23: #{downsample_forward.1} parent=5 // pred_region
      // Predicated region
      $region25: #{downsample_forward.1} parent=23 // pred_check
        %p289 = pneg %p48
      $region26: #{downsample_forward.1} parent=23 // pred_check_branch
        %291 = sbr.rel (%p289) target = $region28
      $region27: #{downsample_forward.1} parent=23 // pred_region
        %s292 = smul.u32 8, %s22
        %p293 = scmp.lt.s32.totalorder %s21, 1
        %s294 = scalar_select %p293, %s21, 1
        %p295 = scmp.lt.s32.totalorder %s292, 7
        %s296 = scalar_select %p295, %s292, 7
        %s297 = smul.addr %s296, 2
        %s298 = smul.addr %s294, 16
        %s299 = sadd.s32 %s297, %s298
        %s300 = smul.addr %s299, 4
        %s301 = scalar_lea.vmem %s0, %s300
        %s302 = smul.u32 8, %s22
      $region28: #{downsample_forward.1} parent=23 // pred_fallthru
        _
      // Predicated region
      $region29: #{downsample_forward.1} parent=23 // pred_check
        %p303 = pneg %p76
      $region30: #{downsample_forward.1} parent=23 // pred_check_branch
        %305 = sbr.rel (%p303) target = $region32
      $region31: #{downsample_forward.1} parent=23 // pred_region
        %s306 = smul.u32 8, %s22
        %p307 = scmp.lt.s32.totalorder %s21, 1
        %s308 = scalar_select %p307, %s21, 1
        %p309 = scmp.lt.s32.totalorder %s306, 7
        %s310 = scalar_select %p309, %s306, 7
        %s311 = smul.addr %s310, 2
        %s312 = smul.addr %s308, 16
        %s313 = sadd.s32 %s311, %s312
        %s314 = smul.addr %s313, 4
        %s315 = scalar_lea.vmem %s1, %s314
        %s316 = smul.u32 8, %s22
      $region32: #{downsample_forward.1} parent=23 // pred_fallthru
        _
      // Predicated region
      $region33: #{downsample_forward.1} parent=23 // pred_check
        %p317 = pneg %p104
      $region34: #{downsample_forward.1} parent=23 // pred_check_branch
        %319 = sbr.rel (%p317) target = $region36
      $region35: #{downsample_forward.1} parent=23 // pred_region
        %s320 = smul.u32 8, %s22
        %p321 = scmp.lt.s32.totalorder %s21, 1
        %s322 = scalar_select %p321, %s21, 1
        %p323 = scmp.lt.s32.totalorder %s320, 7
        %s324 = scalar_select %p323, %s320, 7
        %s325 = smul.addr %s324, 2
        %s326 = smul.addr %s322, 16
        %s327 = sadd.s32 %s325, %s326
        %s328 = smul.addr %s327, 4
        %s329 = scalar_lea.vmem %s2, %s328
        %s330 = smul.u32 8, %s22
      $region36: #{downsample_forward.1} parent=23 // pred_fallthru
        _
      // Predicated region
      $region37: #{downsample_forward.1} parent=23 // pred_check
        %p331 = pneg %p132
      $region38: #{downsample_forward.1} parent=23 // pred_check_branch
        %333 = sbr.rel (%p331) target = $region40
      $region39: #{downsample_forward.1} parent=23 // pred_region
        %s334 = smul.u32 8, %s22
        %p335 = scmp.lt.s32.totalorder %s21, 1
        %s336 = scalar_select %p335, %s21, 1
        %p337 = scmp.lt.s32.totalorder %s334, 7
        %s338 = scalar_select %p337, %s334, 7
        %s339 = smul.addr %s338, 2
        %s340 = smul.addr %s336, 16
        %s341 = sadd.s32 %s339, %s340
        %s342 = smul.addr %s341, 4
        %s343 = scalar_lea.vmem %s3, %s342
        %s344 = smul.u32 8, %s22
      $region40: #{downsample_forward.1} parent=23 // pred_fallthru
        _
      // Predicated region
      $region41: #{downsample_forward.1} parent=23 // pred_check
        %p345 = pneg %p160
      $region42: #{downsample_forward.1} parent=23 // pred_check_branch
        %347 = sbr.rel (%p345) target = $region44
      $region43: #{downsample_forward.1} parent=23 // pred_region
        %s348 = smul.u32 8, %s22
        %p349 = scmp.lt.s32.totalorder %s21, 1
        %s350 = scalar_select %p349, %s21, 1
        %p351 = scmp.lt.s32.totalorder %s348, 7
        %s352 = scalar_select %p351, %s348, 7
        %s353 = smul.addr %s352, 2
        %s354 = smul.addr %s350, 16
        %s355 = sadd.s32 %s353, %s354
        %s356 = smul.addr %s355, 4
        %s357 = scalar_lea.vmem %s4, %s356
        %s358 = smul.u32 8, %s22
      $region44: #{downsample_forward.1} parent=23 // pred_fallthru
        _
      // Predicated region
      $region45: #{downsample_forward.1} parent=23 // pred_check
        %p359 = pneg %p188
      $region46: #{downsample_forward.1} parent=23 // pred_check_branch
        %361 = sbr.rel (%p359) target = $region48
      $region47: #{downsample_forward.1} parent=23 // pred_region
        %s362 = smul.u32 8, %s22
        %p363 = scmp.lt.s32.totalorder %s21, 1
        %s364 = scalar_select %p363, %s21, 1
        %p365 = scmp.lt.s32.totalorder %s362, 7
        %s366 = scalar_select %p365, %s362, 7
        %s367 = smul.addr %s366, 2
        %s368 = smul.addr %s364, 16
        %s369 = sadd.s32 %s367, %s368
        %s370 = smul.addr %s369, 4
        %s371 = scalar_lea.vmem %s5, %s370
        %s372 = smul.u32 8, %s22
      $region48: #{downsample_forward.1} parent=23 // pred_fallthru
        _
    $region24: #{downsample_forward.1} parent=5 // pred_fallthru
      _
    %p373 = scmp.le.s32.totalorder 1, %s14
    %p374 = scmp.lt.s32.totalorder %s14, 3
    %p375 = pnand %p373, %p374
    %p376 = pneg %p375
    // Predicated region
    $region49: #{downsample_forward.1} parent=5 // pred_check
      _
    $region50: #{downsample_forward.1} parent=5 // pred_check_branch
      %378 = sbr.rel (%p375) target = $region52
    $region51: #{downsample_forward.1} parent=5 // pred_region
      %s379 = ssub.s32 %s14, 1
      %s380 = smul.u32 8, %s24
      %p381 = scmp.lt.s32.totalorder %s23, 1
      %s382 = scalar_select %p381, %s23, 1
      %p383 = scmp.lt.s32.totalorder %s380, 7
      %s384 = scalar_select %p383, %s380, 7
      %s385 = smul.addr %s384, 2
      %s386 = smul.addr %s382, 16
      %s387 = sadd.s32 %s385, %s386
      %s388 = smul.addr %s387, 4
      %s389 = scalar_lea.vmem %s0, %s388
      %p390 = pneg %p54
      %p391 = pneg %p51
      %s392 = smul.u32 8, %s24
      %p393 = scmp.lt.s32.totalorder %s23, 1
      %s394 = scalar_select %p393, %s23, 1
      %p395 = scmp.lt.s32.totalorder %s392, 7
      %s396 = scalar_select %p395, %s392, 7
      %s397 = smul.addr %s396, 2
      %s398 = smul.addr %s394, 16
      %s399 = sadd.s32 %s397, %s398
      %s400 = smul.addr %s399, 4
      %s401 = scalar_lea.vmem %s1, %s400
      %p402 = pneg %p82
      %p403 = pneg %p79
      %s404 = smul.u32 8, %s24
      %p405 = scmp.lt.s32.totalorder %s23, 1
      %s406 = scalar_select %p405, %s23, 1
      %p407 = scmp.lt.s32.totalorder %s404, 7
      %s408 = scalar_select %p407, %s404, 7
      %s409 = smul.addr %s408, 2
      %s410 = smul.addr %s406, 16
      %s411 = sadd.s32 %s409, %s410
      %s412 = smul.addr %s411, 4
      %s413 = scalar_lea.vmem %s2, %s412
      %p414 = pneg %p110
      %p415 = pneg %p107
      %s416 = smul.u32 8, %s24
      %p417 = scmp.lt.s32.totalorder %s23, 1
      %s418 = scalar_select %p417, %s23, 1
      %p419 = scmp.lt.s32.totalorder %s416, 7
      %s420 = scalar_select %p419, %s416, 7
      %s421 = smul.addr %s420, 2
      %s422 = smul.addr %s418, 16
      %s423 = sadd.s32 %s421, %s422
      %s424 = smul.addr %s423, 4
      %s425 = scalar_lea.vmem %s3, %s424
      %p426 = pneg %p138
      %p427 = pneg %p135
      %s428 = smul.u32 8, %s24
      %p429 = scmp.lt.s32.totalorder %s23, 1
      %s430 = scalar_select %p429, %s23, 1
      %p431 = scmp.lt.s32.totalorder %s428, 7
      %s432 = scalar_select %p431, %s428, 7
      %s433 = smul.addr %s432, 2
      %s434 = smul.addr %s430, 16
      %s435 = sadd.s32 %s433, %s434
      %s436 = smul.addr %s435, 4
      %s437 = scalar_lea.vmem %s4, %s436
      %p438 = pneg %p166
      %p439 = pneg %p163
      %s440 = smul.u32 8, %s24
      %p441 = scmp.lt.s32.totalorder %s23, 1
      %s442 = scalar_select %p441, %s23, 1
      %p443 = scmp.lt.s32.totalorder %s440, 7
      %s444 = scalar_select %p443, %s440, 7
      %s445 = smul.addr %s444, 2
      %s446 = smul.addr %s442, 16
      %s447 = sadd.s32 %s445, %s446
      %s448 = smul.addr %s447, 4
      %s449 = scalar_lea.vmem %s5, %s448
      %p450 = pneg %p194
      %p451 = pneg %p191
      %p452 = pneg %p215
      %p453 = pneg %p212
      %p454 = pneg %p236
      %p455 = pneg %p233
      %p456 = pneg %p264
      %p457 = pneg %p261
      %p458 = scmp.lt.s32.totalorder %s23, 1
      %s459 = scalar_select %p458, %s23, 1
      %p460 = scmp.lt.s32.totalorder %s24, 0
      %s461 = scalar_select %p460, %s24, 0
      %s462 = smul.addr %s461, 8
      %s463 = smul.addr %s459, 8
      %s464 = sadd.s32 %s462, %s463
      %s465 = smul.addr %s464, 8
      %s466 = scalar_lea.vmem %s8, %s465
      %s467 = smul.u32 8, %s24
      %p468 = scmp.lt.s32.totalorder %s23, 1
      %s469 = scalar_select %p468, %s23, 1
      %p470 = scmp.lt.s32.totalorder %s467, 7
      %s471 = scalar_select %p470, %s467, 7
      %s472 = smul.addr %s471, 2
      %s473 = smul.addr %s469, 16
      %s474 = sadd.s32 %s472, %s473
      %s475 = smul.addr %s474, 4
      %s476 = scalar_lea.vmem %s0, %s475
      %s477 = smul.u32 8, %s24
      %s478 = smul.u32 8, %s24
      %p479 = scmp.lt.s32.totalorder %s23, 1
      %s480 = scalar_select %p479, %s23, 1
      %p481 = scmp.lt.s32.totalorder %s478, 7
      %s482 = scalar_select %p481, %s478, 7
      %s483 = smul.addr %s482, 2
      %s484 = smul.addr %s480, 16
      %s485 = sadd.s32 %s483, %s484
      %s486 = smul.addr %s485, 4
      %s487 = scalar_lea.vmem %s1, %s486
      %s488 = smul.u32 8, %s24
      %s489 = smul.u32 8, %s24
      %p490 = scmp.lt.s32.totalorder %s23, 1
      %s491 = scalar_select %p490, %s23, 1
      %p492 = scmp.lt.s32.totalorder %s489, 7
      %s493 = scalar_select %p492, %s489, 7
      %s494 = smul.addr %s493, 2
      %s495 = smul.addr %s491, 16
      %s496 = sadd.s32 %s494, %s495
      %s497 = smul.addr %s496, 4
      %s498 = scalar_lea.vmem %s2, %s497
      %s499 = smul.u32 8, %s24
      %s500 = smul.u32 8, %s24
      %p501 = scmp.lt.s32.totalorder %s23, 1
      %s502 = scalar_select %p501, %s23, 1
      %p503 = scmp.lt.s32.totalorder %s500, 7
      %s504 = scalar_select %p503, %s500, 7
      %s505 = smul.addr %s504, 2
      %s506 = smul.addr %s502, 16
      %s507 = sadd.s32 %s505, %s506
      %s508 = smul.addr %s507, 4
      %s509 = scalar_lea.vmem %s3, %s508
      %s510 = smul.u32 8, %s24
      %s511 = smul.u32 8, %s24
      %p512 = scmp.lt.s32.totalorder %s23, 1
      %s513 = scalar_select %p512, %s23, 1
      %p514 = scmp.lt.s32.totalorder %s511, 7
      %s515 = scalar_select %p514, %s511, 7
      %s516 = smul.addr %s515, 2
      %s517 = smul.addr %s513, 16
      %s518 = sadd.s32 %s516, %s517
      %s519 = smul.addr %s518, 4
      %s520 = scalar_lea.vmem %s4, %s519
      %s521 = smul.u32 8, %s24
      %s522 = smul.u32 8, %s24
      %p523 = scmp.lt.s32.totalorder %s23, 1
      %s524 = scalar_select %p523, %s23, 1
      %p525 = scmp.lt.s32.totalorder %s522, 7
      %s526 = scalar_select %p525, %s522, 7
      %s527 = smul.addr %s526, 2
      %s528 = smul.addr %s524, 16
      %s529 = sadd.s32 %s527, %s528
      %s530 = smul.addr %s529, 4
      %s531 = scalar_lea.vmem %s5, %s530
      %s532 = smul.u32 8, %s24
      %p533 = scmp.lt.s32.totalorder %s23, 1
      %s534 = scalar_select %p533, %s23, 1
      %p535 = scmp.lt.s32.totalorder %s24, 0
      %s536 = scalar_select %p535, %s24, 0
      %s537 = smul.addr %s536, 8
      %s538 = smul.addr %s534, 8
      %s539 = sadd.s32 %s537, %s538
      %s540 = smul.addr %s539, 8
      %s541 = scalar_lea.vmem %s8, %s540
      %v543 = vld [vmem:[%s476] sm:$0xf]
      %v544 = vld [vmem:[%s476 + $0x8] sm:$0xf]
      %v545 = vld [vmem:[%s476 + $0x10] sm:$0xf]
      %v546 = vld [vmem:[%s476 + $0x18] sm:$0xf]
      %v547 = vld [vmem:[%s476 + $0x20] sm:$0xf]
      %v548 = vld [vmem:[%s476 + $0x28] sm:$0xf]
      %v549 = vld [vmem:[%s476 + $0x30] sm:$0xf]
      %v550 = vld [vmem:[%s476 + $0x38] sm:$0xf]
      %v559 = vunpack.c.l.b16 %v543
      %v560 = vunpack.c.l.b16 %v544
      %v561 = vunpack.c.l.b16 %v545
      %v562 = vunpack.c.l.b16 %v546
      %v563 = vunpack.c.l.b16 %v547
      %v564 = vunpack.c.l.b16 %v548
      %v565 = vunpack.c.l.b16 %v549
      %v566 = vunpack.c.l.b16 %v550
      %v567 = vpack.c.b16 %v560, %v559
      %v568 = vpack.c.b16 %v562, %v561
      %v569 = vpack.c.b16 %v564, %v563
      %v570 = vpack.c.b16 %v566, %v565
      %vm575 = vcmask 31744
      %576 = vst.msk [vmem:[#allocation2] sm:$0xff] %vm575, %v567
      %577 = vst.msk [vmem:[#allocation2 + $0x8] sm:$0xff] %vm575, %v568
      %578 = vst.msk [vmem:[#allocation2 + $0x10] sm:$0xff] %vm575, %v569
      %579 = vst.msk [vmem:[#allocation2 + $0x18] sm:$0xff] %vm575, %v570
      %v580 = vld [vmem:[%s487] sm:$0xf]
      %v581 = vld [vmem:[%s487 + $0x8] sm:$0xf]
      %v582 = vld [vmem:[%s487 + $0x10] sm:$0xf]
      %v583 = vld [vmem:[%s487 + $0x18] sm:$0xf]
      %v584 = vld [vmem:[%s487 + $0x20] sm:$0xf]
      %v585 = vld [vmem:[%s487 + $0x28] sm:$0xf]
      %v586 = vld [vmem:[%s487 + $0x30] sm:$0xf]
      %v587 = vld [vmem:[%s487 + $0x38] sm:$0xf]
      %v596 = vunpack.c.l.b16 %v580
      %v597 = vunpack.c.l.b16 %v581
      %v598 = vunpack.c.l.b16 %v582
      %v599 = vunpack.c.l.b16 %v583
      %v600 = vunpack.c.l.b16 %v584
      %v601 = vunpack.c.l.b16 %v585
      %v602 = vunpack.c.l.b16 %v586
      %v603 = vunpack.c.l.b16 %v587
      %v604 = vpack.c.b16 %v597, %v596
      %v605 = vpack.c.b16 %v599, %v598
      %v606 = vpack.c.b16 %v601, %v600
      %v607 = vpack.c.b16 %v603, %v602
      %608 = vrot.lane.b32.xlu0 %v604, 4
      %v609 = vpop.permute.xlu0 %608
      %610 = vrot.lane.b32.xlu0 %v605, 4
      %v611 = vpop.permute.xlu0 %610
      %612 = vrot.lane.b32.xlu0 %v606, 4
      %v613 = vpop.permute.xlu0 %612
      %614 = vrot.lane.b32.xlu0 %v607, 4
      %v615 = vpop.permute.xlu0 %614
      %vm620 = vcmask 64544
      %621 = vst.msk [vmem:[#allocation2] sm:$0xff] %vm620, %v609
      %622 = vst.msk [vmem:[#allocation2 + $0x8] sm:$0xff] %vm620, %v611
      %623 = vst.msk [vmem:[#allocation2 + $0x10] sm:$0xff] %vm620, %v613
      %624 = vst.msk [vmem:[#allocation2 + $0x18] sm:$0xff] %vm620, %v615
      %v625 = vld [vmem:[%s476] sm:$0xf]
      %v626 = vld [vmem:[%s476 + $0x4] sm:$0x1]
      %v627 = vld [vmem:[%s476 + $0x8] sm:$0xf]
      %v628 = vld [vmem:[%s476 + $0xc] sm:$0x1]
      %v629 = vld [vmem:[%s476 + $0x10] sm:$0xf]
      %v630 = vld [vmem:[%s476 + $0x14] sm:$0x1]
      %v631 = vld [vmem:[%s476 + $0x18] sm:$0xf]
      %v632 = vld [vmem:[%s476 + $0x1c] sm:$0x1]
      %v633 = vld [vmem:[%s476 + $0x20] sm:$0xf]
      %v634 = vld [vmem:[%s476 + $0x24] sm:$0x1]
      %v635 = vld [vmem:[%s476 + $0x28] sm:$0xf]
      %v636 = vld [vmem:[%s476 + $0x2c] sm:$0x1]
      %v637 = vld [vmem:[%s476 + $0x30] sm:$0xf]
      %v638 = vld [vmem:[%s476 + $0x34] sm:$0x1]
      %v639 = vld [vmem:[%s476 + $0x38] sm:$0xf]
      %v640 = vld [vmem:[%s476 + $0x3c] sm:$0x1]
      %vm641 = vsmask.f32 3328
      %vm642 = vsmask.f32 7440
      %vm643 = vmor %vm641, %vm642
      %v645 = vshrl.u32 %v625, 16
      %v647 = vrot.slane %v645, 4
      %v648 = vshll.u32 %v625, 16
      %v650 = vrot.slane %v648, 5
      %v651 = vor.u32 %v647, %v650
      %v652 = vrot.slane %v651, 4
      %v654 = vshll.u32 %v626, 16
      %v656 = vrot.slane %v654, 5
      %v657 = vsel %vm643, %v652, %v656
      %v659 = vshrl.u32 %v627, 16
      %v661 = vrot.slane %v659, 4
      %v662 = vshll.u32 %v627, 16
      %v664 = vrot.slane %v662, 5
      %v665 = vor.u32 %v661, %v664
      %v666 = vrot.slane %v665, 4
      %v668 = vshll.u32 %v628, 16
      %v670 = vrot.slane %v668, 5
      %v671 = vsel %vm643, %v666, %v670
      %v673 = vshrl.u32 %v629, 16
      %v675 = vrot.slane %v673, 4
      %v676 = vshll.u32 %v629, 16
      %v678 = vrot.slane %v676, 5
      %v679 = vor.u32 %v675, %v678
      %v680 = vrot.slane %v679, 4
      %v682 = vshll.u32 %v630, 16
      %v684 = vrot.slane %v682, 5
      %v685 = vsel %vm643, %v680, %v684
      %v687 = vshrl.u32 %v631, 16
      %v689 = vrot.slane %v687, 4
      %v690 = vshll.u32 %v631, 16
      %v692 = vrot.slane %v690, 5
      %v693 = vor.u32 %v689, %v692
      %v694 = vrot.slane %v693, 4
      %v696 = vshll.u32 %v632, 16
      %v698 = vrot.slane %v696, 5
      %v699 = vsel %vm643, %v694, %v698
      %v701 = vshrl.u32 %v633, 16
      %v703 = vrot.slane %v701, 4
      %v704 = vshll.u32 %v633, 16
      %v706 = vrot.slane %v704, 5
      %v707 = vor.u32 %v703, %v706
      %v708 = vrot.slane %v707, 4
      %v710 = vshll.u32 %v634, 16
      %v712 = vrot.slane %v710, 5
      %v713 = vsel %vm643, %v708, %v712
      %v715 = vshrl.u32 %v635, 16
      %v717 = vrot.slane %v715, 4
      %v718 = vshll.u32 %v635, 16
      %v720 = vrot.slane %v718, 5
      %v721 = vor.u32 %v717, %v720
      %v722 = vrot.slane %v721, 4
      %v724 = vshll.u32 %v636, 16
      %v726 = vrot.slane %v724, 5
      %v727 = vsel %vm643, %v722, %v726
      %v729 = vshrl.u32 %v637, 16
      %v731 = vrot.slane %v729, 4
      %v732 = vshll.u32 %v637, 16
      %v734 = vrot.slane %v732, 5
      %v735 = vor.u32 %v731, %v734
      %v736 = vrot.slane %v735, 4
      %v738 = vshll.u32 %v638, 16
      %v740 = vrot.slane %v738, 5
      %v741 = vsel %vm643, %v736, %v740
      %v743 = vshrl.u32 %v639, 16
      %v745 = vrot.slane %v743, 4
      %v746 = vshll.u32 %v639, 16
      %v748 = vrot.slane %v746, 5
      %v749 = vor.u32 %v745, %v748
      %v750 = vrot.slane %v749, 4
      %v752 = vshll.u32 %v640, 16
      %v754 = vrot.slane %v752, 5
      %v755 = vsel %vm643, %v750, %v754
      %v756 = vunpack.c.l.b16 %v657
      %v757 = vunpack.c.l.b16 %v671
      %v758 = vunpack.c.l.b16 %v685
      %v759 = vunpack.c.l.b16 %v699
      %v760 = vunpack.c.l.b16 %v713
      %v761 = vunpack.c.l.b16 %v727
      %v762 = vunpack.c.l.b16 %v741
      %v763 = vunpack.c.l.b16 %v755
      %v764 = vpack.c.b16 %v757, %v756
      %v765 = vpack.c.b16 %v759, %v758
      %v766 = vpack.c.b16 %v761, %v760
      %v767 = vpack.c.b16 %v763, %v762
      %768 = vrot.lane.b32.xlu0 %v764, 8
      %v769 = vpop.permute.xlu0 %768
      %770 = vrot.lane.b32.xlu0 %v765, 8
      %v771 = vpop.permute.xlu0 %770
      %772 = vrot.lane.b32.xlu0 %v766, 8
      %v773 = vpop.permute.xlu0 %772
      %774 = vrot.lane.b32.xlu0 %v767, 8
      %v775 = vpop.permute.xlu0 %774
      %vm780 = vcmask 97344
      %781 = vst.msk [vmem:[#allocation2] sm:$0xff] %vm780, %v769
      %782 = vst.msk [vmem:[#allocation2 + $0x8] sm:$0xff] %vm780, %v771
      %783 = vst.msk [vmem:[#allocation2 + $0x10] sm:$0xff] %vm780, %v773
      %784 = vst.msk [vmem:[#allocation2 + $0x18] sm:$0xff] %vm780, %v775
      %v785 = vld [vmem:[%s498] sm:$0xf]
      %v786 = vld [vmem:[%s498 + $0x8] sm:$0xf]
      %v787 = vld [vmem:[%s498 + $0x10] sm:$0xf]
      %v788 = vld [vmem:[%s498 + $0x18] sm:$0xf]
      %v789 = vld [vmem:[%s498 + $0x20] sm:$0xf]
      %v790 = vld [vmem:[%s498 + $0x28] sm:$0xf]
      %v791 = vld [vmem:[%s498 + $0x30] sm:$0xf]
      %v792 = vld [vmem:[%s498 + $0x38] sm:$0xf]
      %v801 = vunpack.c.l.b16 %v785
      %v802 = vunpack.c.l.b16 %v786
      %v803 = vunpack.c.l.b16 %v787
      %v804 = vunpack.c.l.b16 %v788
      %v805 = vunpack.c.l.b16 %v789
      %v806 = vunpack.c.l.b16 %v790
      %v807 = vunpack.c.l.b16 %v791
      %v808 = vunpack.c.l.b16 %v792
      %v809 = vpack.c.b16 %v802, %v801
      %v810 = vpack.c.b16 %v804, %v803
      %v811 = vpack.c.b16 %v806, %v805
      %v812 = vpack.c.b16 %v808, %v807
      %813 = vrot.lane.b32.xlu0 %v809, 12
      %v814 = vpop.permute.xlu0 %813
      %815 = vrot.lane.b32.xlu0 %v810, 12
      %v816 = vpop.permute.xlu0 %815
      %817 = vrot.lane.b32.xlu0 %v811, 12
      %v818 = vpop.permute.xlu0 %817
      %819 = vrot.lane.b32.xlu0 %v812, 12
      %v820 = vpop.permute.xlu0 %819
      %vm825 = vcmask 130144
      %826 = vst.msk [vmem:[#allocation2] sm:$0xff] %vm825, %v814
      %827 = vst.msk [vmem:[#allocation2 + $0x8] sm:$0xff] %vm825, %v816
      %828 = vst.msk [vmem:[#allocation2 + $0x10] sm:$0xff] %vm825, %v818
      %829 = vst.msk [vmem:[#allocation2 + $0x18] sm:$0xff] %vm825, %v820
      %v830 = vld [vmem:[%s509] sm:$0xf]
      %v831 = vld [vmem:[%s509 + $0x8] sm:$0xf]
      %v832 = vld [vmem:[%s509 + $0x10] sm:$0xf]
      %v833 = vld [vmem:[%s509 + $0x18] sm:$0xf]
      %v834 = vld [vmem:[%s509 + $0x20] sm:$0xf]
      %v835 = vld [vmem:[%s509 + $0x28] sm:$0xf]
      %v836 = vld [vmem:[%s509 + $0x30] sm:$0xf]
      %v837 = vld [vmem:[%s509 + $0x38] sm:$0xf]
      %v846 = vunpack.c.l.b16 %v830
      %v847 = vunpack.c.l.b16 %v831
      %v848 = vunpack.c.l.b16 %v832
      %v849 = vunpack.c.l.b16 %v833
      %v850 = vunpack.c.l.b16 %v834
      %v851 = vunpack.c.l.b16 %v835
      %v852 = vunpack.c.l.b16 %v836
      %v853 = vunpack.c.l.b16 %v837
      %v854 = vpack.c.b16 %v847, %v846
      %v855 = vpack.c.b16 %v849, %v848
      %v856 = vpack.c.b16 %v851, %v850
      %v857 = vpack.c.b16 %v853, %v852
      %858 = vrot.lane.b32.xlu0 %v854, 16
      %v859 = vpop.permute.xlu0 %858
      %860 = vrot.lane.b32.xlu0 %v855, 16
      %v861 = vpop.permute.xlu0 %860
      %862 = vrot.lane.b32.xlu0 %v856, 16
      %v863 = vpop.permute.xlu0 %862
      %864 = vrot.lane.b32.xlu0 %v857, 16
      %v865 = vpop.permute.xlu0 %864
      %vm870 = vcmask 162944
      %871 = vst.msk [vmem:[#allocation2] sm:$0xff] %vm870, %v859
      %872 = vst.msk [vmem:[#allocation2 + $0x8] sm:$0xff] %vm870, %v861
      %873 = vst.msk [vmem:[#allocation2 + $0x10] sm:$0xff] %vm870, %v863
      %874 = vst.msk [vmem:[#allocation2 + $0x18] sm:$0xff] %vm870, %v865
      %v875 = vld [vmem:[%s498] sm:$0xf]
      %v876 = vld [vmem:[%s498 + $0x4] sm:$0x1]
      %v877 = vld [vmem:[%s498 + $0x8] sm:$0xf]
      %v878 = vld [vmem:[%s498 + $0xc] sm:$0x1]
      %v879 = vld [vmem:[%s498 + $0x10] sm:$0xf]
      %v880 = vld [vmem:[%s498 + $0x14] sm:$0x1]
      %v881 = vld [vmem:[%s498 + $0x18] sm:$0xf]
      %v882 = vld [vmem:[%s498 + $0x1c] sm:$0x1]
      %v883 = vld [vmem:[%s498 + $0x20] sm:$0xf]
      %v884 = vld [vmem:[%s498 + $0x24] sm:$0x1]
      %v885 = vld [vmem:[%s498 + $0x28] sm:$0xf]
      %v886 = vld [vmem:[%s498 + $0x2c] sm:$0x1]
      %v887 = vld [vmem:[%s498 + $0x30] sm:$0xf]
      %v888 = vld [vmem:[%s498 + $0x34] sm:$0x1]
      %v889 = vld [vmem:[%s498 + $0x38] sm:$0xf]
      %v890 = vld [vmem:[%s498 + $0x3c] sm:$0x1]
      %v892 = vshrl.u32 %v875, 16
      %v894 = vrot.slane %v892, 4
      %v895 = vshll.u32 %v875, 16
      %v897 = vrot.slane %v895, 5
      %v898 = vor.u32 %v894, %v897
      %v899 = vrot.slane %v898, 4
      %v901 = vshll.u32 %v876, 16
      %v903 = vrot.slane %v901, 5
      %v904 = vsel %vm643, %v899, %v903
      %v906 = vshrl.u32 %v877, 16
      %v908 = vrot.slane %v906, 4
      %v909 = vshll.u32 %v877, 16
      %v911 = vrot.slane %v909, 5
      %v912 = vor.u32 %v908, %v911
      %v913 = vrot.slane %v912, 4
      %v915 = vshll.u32 %v878, 16
      %v917 = vrot.slane %v915, 5
      %v918 = vsel %vm643, %v913, %v917
      %v920 = vshrl.u32 %v879, 16
      %v922 = vrot.slane %v920, 4
      %v923 = vshll.u32 %v879, 16
      %v925 = vrot.slane %v923, 5
      %v926 = vor.u32 %v922, %v925
      %v927 = vrot.slane %v926, 4
      %v929 = vshll.u32 %v880, 16
      %v931 = vrot.slane %v929, 5
      %v932 = vsel %vm643, %v927, %v931
      %v934 = vshrl.u32 %v881, 16
      %v936 = vrot.slane %v934, 4
      %v937 = vshll.u32 %v881, 16
      %v939 = vrot.slane %v937, 5
      %v940 = vor.u32 %v936, %v939
      %v941 = vrot.slane %v940, 4
      %v943 = vshll.u32 %v882, 16
      %v945 = vrot.slane %v943, 5
      %v946 = vsel %vm643, %v941, %v945
      %v948 = vshrl.u32 %v883, 16
      %v950 = vrot.slane %v948, 4
      %v951 = vshll.u32 %v883, 16
      %v953 = vrot.slane %v951, 5
      %v954 = vor.u32 %v950, %v953
      %v955 = vrot.slane %v954, 4
      %v957 = vshll.u32 %v884, 16
      %v959 = vrot.slane %v957, 5
      %v960 = vsel %vm643, %v955, %v959
      %v962 = vshrl.u32 %v885, 16
      %v964 = vrot.slane %v962, 4
      %v965 = vshll.u32 %v885, 16
      %v967 = vrot.slane %v965, 5
      %v968 = vor.u32 %v964, %v967
      %v969 = vrot.slane %v968, 4
      %v971 = vshll.u32 %v886, 16
      %v973 = vrot.slane %v971, 5
      %v974 = vsel %vm643, %v969, %v973
      %v976 = vshrl.u32 %v887, 16
      %v978 = vrot.slane %v976, 4
      %v979 = vshll.u32 %v887, 16
      %v981 = vrot.slane %v979, 5
      %v982 = vor.u32 %v978, %v981
      %v983 = vrot.slane %v982, 4
      %v985 = vshll.u32 %v888, 16
      %v987 = vrot.slane %v985, 5
      %v988 = vsel %vm643, %v983, %v987
      %v990 = vshrl.u32 %v889, 16
      %v992 = vrot.slane %v990, 4
      %v993 = vshll.u32 %v889, 16
      %v995 = vrot.slane %v993, 5
      %v996 = vor.u32 %v992, %v995
      %v997 = vrot.slane %v996, 4
      %v999 = vshll.u32 %v890, 16
      %v1001 = vrot.slane %v999, 5
      %v1002 = vsel %vm643, %v997, %v1001
      %v1003 = vunpack.c.l.b16 %v904
      %v1004 = vunpack.c.l.b16 %v918
      %v1005 = vunpack.c.l.b16 %v932
      %v1006 = vunpack.c.l.b16 %v946
      %v1007 = vunpack.c.l.b16 %v960
      %v1008 = vunpack.c.l.b16 %v974
      %v1009 = vunpack.c.l.b16 %v988
      %v1010 = vunpack.c.l.b16 %v1002
      %v1011 = vpack.c.b16 %v1004, %v1003
      %v1012 = vpack.c.b16 %v1006, %v1005
      %v1013 = vpack.c.b16 %v1008, %v1007
      %v1014 = vpack.c.b16 %v1010, %v1009
      %1015 = vrot.lane.b32.xlu0 %v1011, 20
      %v1016 = vpop.permute.xlu0 %1015
      %1017 = vrot.lane.b32.xlu0 %v1012, 20
      %v1018 = vpop.permute.xlu0 %1017
      %1019 = vrot.lane.b32.xlu0 %v1013, 20
      %v1020 = vpop.permute.xlu0 %1019
      %1021 = vrot.lane.b32.xlu0 %v1014, 20
      %v1022 = vpop.permute.xlu0 %1021
      %vm1027 = vcmask 195744
      %1028 = vst.msk [vmem:[#allocation2] sm:$0xff] %vm1027, %v1016
      %1029 = vst.msk [vmem:[#allocation2 + $0x8] sm:$0xff] %vm1027, %v1018
      %1030 = vst.msk [vmem:[#allocation2 + $0x10] sm:$0xff] %vm1027, %v1020
      %1031 = vst.msk [vmem:[#allocation2 + $0x18] sm:$0xff] %vm1027, %v1022
      %v1032 = vld [vmem:[%s520] sm:$0xf]
      %v1033 = vld [vmem:[%s520 + $0x8] sm:$0xf]
      %v1034 = vld [vmem:[%s520 + $0x10] sm:$0xf]
      %v1035 = vld [vmem:[%s520 + $0x18] sm:$0xf]
      %v1036 = vld [vmem:[%s520 + $0x20] sm:$0xf]
      %v1037 = vld [vmem:[%s520 + $0x28] sm:$0xf]
      %v1038 = vld [vmem:[%s520 + $0x30] sm:$0xf]
      %v1039 = vld [vmem:[%s520 + $0x38] sm:$0xf]
      %v1048 = vunpack.c.l.b16 %v1032
      %v1049 = vunpack.c.l.b16 %v1033
      %v1050 = vunpack.c.l.b16 %v1034
      %v1051 = vunpack.c.l.b16 %v1035
      %v1052 = vunpack.c.l.b16 %v1036
      %v1053 = vunpack.c.l.b16 %v1037
      %v1054 = vunpack.c.l.b16 %v1038
      %v1055 = vunpack.c.l.b16 %v1039
      %v1056 = vpack.c.b16 %v1049, %v1048
      %v1057 = vpack.c.b16 %v1051, %v1050
      %v1058 = vpack.c.b16 %v1053, %v1052
      %v1059 = vpack.c.b16 %v1055, %v1054
      %1060 = vrot.lane.b32.xlu0 %v1056, 24
      %v1061 = vpop.permute.xlu0 %1060
      %1062 = vrot.lane.b32.xlu0 %v1057, 24
      %v1063 = vpop.permute.xlu0 %1062
      %1064 = vrot.lane.b32.xlu0 %v1058, 24
      %v1065 = vpop.permute.xlu0 %1064
      %1066 = vrot.lane.b32.xlu0 %v1059, 24
      %v1067 = vpop.permute.xlu0 %1066
      %vm1072 = vcmask 228544
      %1073 = vst.msk [vmem:[#allocation2] sm:$0xff] %vm1072, %v1061
      %1074 = vst.msk [vmem:[#allocation2 + $0x8] sm:$0xff] %vm1072, %v1063
      %1075 = vst.msk [vmem:[#allocation2 + $0x10] sm:$0xff] %vm1072, %v1065
      %1076 = vst.msk [vmem:[#allocation2 + $0x18] sm:$0xff] %vm1072, %v1067
      %v1077 = vld [vmem:[%s531] sm:$0xf]
      %v1078 = vld [vmem:[%s531 + $0x8] sm:$0xf]
      %v1079 = vld [vmem:[%s531 + $0x10] sm:$0xf]
      %v1080 = vld [vmem:[%s531 + $0x18] sm:$0xf]
      %v1081 = vld [vmem:[%s531 + $0x20] sm:$0xf]
      %v1082 = vld [vmem:[%s531 + $0x28] sm:$0xf]
      %v1083 = vld [vmem:[%s531 + $0x30] sm:$0xf]
      %v1084 = vld [vmem:[%s531 + $0x38] sm:$0xf]
      %v1093 = vunpack.c.l.b16 %v1077
      %v1094 = vunpack.c.l.b16 %v1078
      %v1095 = vunpack.c.l.b16 %v1079
      %v1096 = vunpack.c.l.b16 %v1080
      %v1097 = vunpack.c.l.b16 %v1081
      %v1098 = vunpack.c.l.b16 %v1082
      %v1099 = vunpack.c.l.b16 %v1083
      %v1100 = vunpack.c.l.b16 %v1084
      %v1101 = vpack.c.b16 %v1094, %v1093
      %v1102 = vpack.c.b16 %v1096, %v1095
      %v1103 = vpack.c.b16 %v1098, %v1097
      %v1104 = vpack.c.b16 %v1100, %v1099
      %1105 = vrot.lane.b32.xlu0 %v1101, 28
      %v1106 = vpop.permute.xlu0 %1105
      %1107 = vrot.lane.b32.xlu0 %v1102, 28
      %v1108 = vpop.permute.xlu0 %1107
      %1109 = vrot.lane.b32.xlu0 %v1103, 28
      %v1110 = vpop.permute.xlu0 %1109
      %1111 = vrot.lane.b32.xlu0 %v1104, 28
      %v1112 = vpop.permute.xlu0 %1111
      %vm1117 = vcmask 261344
      %1118 = vst.msk [vmem:[#allocation2] sm:$0xff] %vm1117, %v1106
      %1119 = vst.msk [vmem:[#allocation2 + $0x8] sm:$0xff] %vm1117, %v1108
      %1120 = vst.msk [vmem:[#allocation2 + $0x10] sm:$0xff] %vm1117, %v1110
      %1121 = vst.msk [vmem:[#allocation2 + $0x18] sm:$0xff] %vm1117, %v1112
      %v1122 = vld [vmem:[%s520] sm:$0xf]
      %v1123 = vld [vmem:[%s520 + $0x4] sm:$0x1]
      %v1124 = vld [vmem:[%s520 + $0x8] sm:$0xf]
      %v1125 = vld [vmem:[%s520 + $0xc] sm:$0x1]
      %v1126 = vld [vmem:[%s520 + $0x10] sm:$0xf]
      %v1127 = vld [vmem:[%s520 + $0x14] sm:$0x1]
      %v1128 = vld [vmem:[%s520 + $0x18] sm:$0xf]
      %v1129 = vld [vmem:[%s520 + $0x1c] sm:$0x1]
      %v1130 = vld [vmem:[%s520 + $0x20] sm:$0xf]
      %v1131 = vld [vmem:[%s520 + $0x24] sm:$0x1]
      %v1132 = vld [vmem:[%s520 + $0x28] sm:$0xf]
      %v1133 = vld [vmem:[%s520 + $0x2c] sm:$0x1]
      %v1134 = vld [vmem:[%s520 + $0x30] sm:$0xf]
      %v1135 = vld [vmem:[%s520 + $0x34] sm:$0x1]
      %v1136 = vld [vmem:[%s520 + $0x38] sm:$0xf]
      %v1137 = vld [vmem:[%s520 + $0x3c] sm:$0x1]
      %v1139 = vshrl.u32 %v1122, 16
      %v1141 = vrot.slane %v1139, 4
      %v1142 = vshll.u32 %v1122, 16
      %v1144 = vrot.slane %v1142, 5
      %v1145 = vor.u32 %v1141, %v1144
      %v1146 = vrot.slane %v1145, 4
      %v1148 = vshll.u32 %v1123, 16
      %v1150 = vrot.slane %v1148, 5
      %v1151 = vsel %vm643, %v1146, %v1150
      %v1153 = vshrl.u32 %v1124, 16
      %v1155 = vrot.slane %v1153, 4
      %v1156 = vshll.u32 %v1124, 16
      %v1158 = vrot.slane %v1156, 5
      %v1159 = vor.u32 %v1155, %v1158
      %v1160 = vrot.slane %v1159, 4
      %v1162 = vshll.u32 %v1125, 16
      %v1164 = vrot.slane %v1162, 5
      %v1165 = vsel %vm643, %v1160, %v1164
      %v1167 = vshrl.u32 %v1126, 16
      %v1169 = vrot.slane %v1167, 4
      %v1170 = vshll.u32 %v1126, 16
      %v1172 = vrot.slane %v1170, 5
      %v1173 = vor.u32 %v1169, %v1172
      %v1174 = vrot.slane %v1173, 4
      %v1176 = vshll.u32 %v1127, 16
      %v1178 = vrot.slane %v1176, 5
      %v1179 = vsel %vm643, %v1174, %v1178
      %v1181 = vshrl.u32 %v1128, 16
      %v1183 = vrot.slane %v1181, 4
      %v1184 = vshll.u32 %v1128, 16
      %v1186 = vrot.slane %v1184, 5
      %v1187 = vor.u32 %v1183, %v1186
      %v1188 = vrot.slane %v1187, 4
      %v1190 = vshll.u32 %v1129, 16
      %v1192 = vrot.slane %v1190, 5
      %v1193 = vsel %vm643, %v1188, %v1192
      %v1195 = vshrl.u32 %v1130, 16
      %v1197 = vrot.slane %v1195, 4
      %v1198 = vshll.u32 %v1130, 16
      %v1200 = vrot.slane %v1198, 5
      %v1201 = vor.u32 %v1197, %v1200
      %v1202 = vrot.slane %v1201, 4
      %v1204 = vshll.u32 %v1131, 16
      %v1206 = vrot.slane %v1204, 5
      %v1207 = vsel %vm643, %v1202, %v1206
      %v1209 = vshrl.u32 %v1132, 16
      %v1211 = vrot.slane %v1209, 4
      %v1212 = vshll.u32 %v1132, 16
      %v1214 = vrot.slane %v1212, 5
      %v1215 = vor.u32 %v1211, %v1214
      %v1216 = vrot.slane %v1215, 4
      %v1218 = vshll.u32 %v1133, 16
      %v1220 = vrot.slane %v1218, 5
      %v1221 = vsel %vm643, %v1216, %v1220
      %v1223 = vshrl.u32 %v1134, 16
      %v1225 = vrot.slane %v1223, 4
      %v1226 = vshll.u32 %v1134, 16
      %v1228 = vrot.slane %v1226, 5
      %v1229 = vor.u32 %v1225, %v1228
      %v1230 = vrot.slane %v1229, 4
      %v1232 = vshll.u32 %v1135, 16
      %v1234 = vrot.slane %v1232, 5
      %v1235 = vsel %vm643, %v1230, %v1234
      %v1237 = vshrl.u32 %v1136, 16
      %v1239 = vrot.slane %v1237, 4
      %v1240 = vshll.u32 %v1136, 16
      %v1242 = vrot.slane %v1240, 5
      %v1243 = vor.u32 %v1239, %v1242
      %v1244 = vrot.slane %v1243, 4
      %v1246 = vshll.u32 %v1137, 16
      %v1248 = vrot.slane %v1246, 5
      %v1249 = vsel %vm643, %v1244, %v1248
      %v1250 = vunpack.c.l.b16 %v1151
      %v1251 = vunpack.c.l.b16 %v1165
      %v1252 = vunpack.c.l.b16 %v1179
      %v1253 = vunpack.c.l.b16 %v1193
      %v1254 = vunpack.c.l.b16 %v1207
      %v1255 = vunpack.c.l.b16 %v1221
      %v1256 = vunpack.c.l.b16 %v1235
      %v1257 = vunpack.c.l.b16 %v1249
      %v1258 = vpack.c.b16 %v1251, %v1250
      %v1259 = vpack.c.b16 %v1253, %v1252
      %v1260 = vpack.c.b16 %v1255, %v1254
      %v1261 = vpack.c.b16 %v1257, %v1256
      %1262 = vrot.lane.b32.xlu0 %v1258, 32
      %v1263 = vpop.permute.xlu0 %1262
      %1264 = vrot.lane.b32.xlu0 %v1259, 32
      %v1265 = vpop.permute.xlu0 %1264
      %1266 = vrot.lane.b32.xlu0 %v1260, 32
      %v1267 = vpop.permute.xlu0 %1266
      %1268 = vrot.lane.b32.xlu0 %v1261, 32
      %v1269 = vpop.permute.xlu0 %1268
      %vm1274 = vcmask 294144
      %1275 = vst.msk [vmem:[#allocation2] sm:$0xff] %vm1274, %v1263
      %1276 = vst.msk [vmem:[#allocation2 + $0x8] sm:$0xff] %vm1274, %v1265
      %1277 = vst.msk [vmem:[#allocation2 + $0x10] sm:$0xff] %vm1274, %v1267
      %1278 = vst.msk [vmem:[#allocation2 + $0x18] sm:$0xff] %vm1274, %v1269
      %v1279 = vld [vmem:[#allocation2] sm:$0xff]
      %v1280 = vld [vmem:[#allocation2 + $0x8] sm:$0xff]
      %v1281 = vld [vmem:[#allocation2 + $0x10] sm:$0xff]
      %v1282 = vld [vmem:[#allocation2 + $0x18] sm:$0xff]
      %v1283 = vld [vmem:[%s6] sm:$0xf]
      %v1284 = vld [vmem:[%s6 + $0x4] sm:$0xf]
      %v1285 = vld [vmem:[%s6 + $0x8] sm:$0xf]
      %v1286 = vld [vmem:[%s6 + $0xc] sm:$0xf]
      %v1287 = vld [vmem:[%s6 + $0x10] sm:$0x3]
      %v1288 = vld [vmem:[%s7] sm:$0x1]
      %v1290 = vlaneseq
      %v1291 = vshrl.u32 %v1290, 7
      %v1292 = vsub.s32 0, %v1291
      %v1293 = vrot.slane %v1288, %v1292
      %v1300 = vunpack.c.l.b16 %v1283
      %v1301 = vunpack.c.l.b16 %v1284
      %v1302 = vunpack.c.l.b16 %v1285
      %v1303 = vunpack.c.l.b16 %v1286
      %v1304 = vunpack.c.l.b16 %v1287
      %v1305 = vpack.c.b16 %v1301, %v1300
      %v1306 = vpack.c.b16 %v1303, %v1302
      %v1307 = vpack.c.b16 %v1304, %v1304
      %vm1310 = vcmask 293888
      %v1312 = vsel %vm1310, %v1279, 0
      %v1315 = vsel %vm1310, %v1280, 0
      %v1318 = vsel %vm1310, %v1281, 0
      %v1321 = vsel %vm1310, %v1282, 0
      %vm1323 = vcmask 1041408
      %v1325 = vsel %vm1323, %v1307, 0
      %1327 = vmatprep.subr.bf16.mxu0 0
      %1328 = vmatpush1.bf16.msra.mxu0 %v1305
      %1329 = vmatprep.subr.bf16.mxu0 0
      %1330 = vmatpush1.bf16.msra.mxu0 %v1306
      %1331 = vmatprep.subr.bf16.mxu0 0
      %1332 = vmatpush1.bf16.msra.mxu0 %v1325
      %1333 = vmatprep.subr.bf16.mxu0 0
      %1334 = vmatpush1.bf16.msra.mxu0 0
      %1335 = vmatprep.subr.bf16.mxu0 0
      %1336 = vmatpush1.bf16.msra.mxu0 0
      %1337 = vmatprep.subr.bf16.mxu0 0
      %1338 = vmatpush1.bf16.msra.mxu0 0
      %1339 = vmatprep.subr.bf16.mxu0 0
      %1340 = vmatpush1.bf16.msra.mxu0 0
      %1341 = vmatprep.subr.bf16.mxu0 0
      %1342 = vmatpush1.bf16.msra.mxu0 0
      %1343 = vmatprep.subr.bf16.mxu0 0
      %1344 = vmatpush1.bf16.msra.mxu0 0
      %1345 = vmatprep.subr.bf16.mxu0 0
      %1346 = vmatpush1.bf16.msra.mxu0 0
      %1347 = vmatprep.subr.bf16.mxu0 0
      %1348 = vmatpush1.bf16.msra.mxu0 0
      %1349 = vmatprep.subr.bf16.mxu0 0
      %1350 = vmatpush1.bf16.msra.mxu0 0
      %1351 = vmatprep.subr.bf16.mxu0 0
      %1352 = vmatpush1.bf16.msra.mxu0 0
      %1353 = vmatprep.subr.bf16.mxu0 0
      %1354 = vmatpush1.bf16.msra.mxu0 0
      %1355 = vmatprep.subr.bf16.mxu0 0
      %1356 = vmatpush1.bf16.msra.mxu0 0
      %1357 = vmatprep.subr.bf16.mxu0 0
      %1358 = vmatpush1.bf16.msra.mxu0 0
      %1359 = vmatprep.mubr.bf16.mxu0 0
      %1360 = vmatmul.mubr.bf16.gmra.mrb[0].mxu0 %v1312
      %v1361 = vpop.f32.mrb[0].mxu0
      %v1362 = vadd.f32 %v1293, %v1361
      %v1363 = vpop.f32.mrb[0].mxu0
      %v1364 = vpop.f32.mrb[0].mxu0
      %v1365 = vadd.f32 %v1293, %v1364
      %v1366 = vpop.f32.mrb[0].mxu0
      %1367 = vmatprep.mubr.bf16.mxu0 0
      %1368 = vmatmul.mubr.bf16.gmra.mrb[0].mxu0 %v1315
      %v1369 = vpop.f32.mrb[0].mxu0
      %v1370 = vadd.f32 %v1293, %v1369
      %v1371 = vpop.f32.mrb[0].mxu0
      %v1372 = vpop.f32.mrb[0].mxu0
      %v1373 = vadd.f32 %v1293, %v1372
      %v1374 = vpop.f32.mrb[0].mxu0
      %1375 = vmatprep.mubr.bf16.mxu0 0
      %1376 = vmatmul.mubr.bf16.gmra.mrb[0].mxu0 %v1318
      %v1377 = vpop.f32.mrb[0].mxu0
      %v1378 = vadd.f32 %v1293, %v1377
      %v1379 = vpop.f32.mrb[0].mxu0
      %v1380 = vpop.f32.mrb[0].mxu0
      %v1381 = vadd.f32 %v1293, %v1380
      %v1382 = vpop.f32.mrb[0].mxu0
      %1383 = vmatprep.mubr.bf16.mxu0 0
      %1384 = vmatmul.mubr.bf16.gmra.mrb[0].mxu0 %v1321
      %v1385 = vpop.f32.mrb[0].mxu0
      %v1386 = vadd.f32 %v1293, %v1385
      %v1387 = vpop.f32.mrb[0].mxu0
      %v1388 = vpop.f32.mrb[0].mxu0
      %v1389 = vadd.f32 %v1293, %v1388
      %v1390 = vpop.f32.mrb[0].mxu0
      %1391 = vdwg.mxu0
      %1392 = vst.msk [vmem:[%s541] sm:$0xff] %vm575, %v1362
      %1393 = vst.msk [vmem:[%s541 + $0x8] sm:$0xff] %vm575, %v1365
      %1394 = vst.msk [vmem:[%s541 + $0x10] sm:$0xff] %vm575, %v1370
      %1395 = vst.msk [vmem:[%s541 + $0x18] sm:$0xff] %vm575, %v1373
      %1396 = vst.msk [vmem:[%s541 + $0x20] sm:$0xff] %vm575, %v1378
      %1397 = vst.msk [vmem:[%s541 + $0x28] sm:$0xff] %vm575, %v1381
      %1398 = vst.msk [vmem:[%s541 + $0x30] sm:$0xff] %vm575, %v1386
      %1399 = vst.msk [vmem:[%s541 + $0x38] sm:$0xff] %vm575, %v1389
      %p1400 = scmp.lt.s32.totalorder %s23, 1
      %s1401 = scalar_select %p1400, %s23, 1
      %p1402 = scmp.lt.s32.totalorder %s24, 0
      %s1403 = scalar_select %p1402, %s24, 0
      %s1404 = smul.addr %s1403, 8
      %s1405 = smul.addr %s1401, 8
      %s1406 = sadd.s32 %s1404, %s1405
      %s1407 = smul.addr %s1406, 8
      %s1408 = scalar_lea.vmem %s8, %s1407
      // Predicated region
      $region53: #{downsample_forward.1} parent=51 // pred_check
        %p1409 = pneg %p261
      $region54: #{downsample_forward.1} parent=51 // pred_check_branch
        %1411 = sbr.rel (%p1409) target = $region56
      $region55: #{downsample_forward.1} parent=51 // pred_region
        _
      $region56: #{downsample_forward.1} parent=51 // pred_fallthru
        _
    $region52: #{downsample_forward.1} parent=5 // pred_fallthru
      _
    %p1412 = scmp.le.s32.totalorder 2, %s14
    // Predicated region
    $region57: #{downsample_forward.1} parent=5 // pred_check
      %p1413 = pneg %p1412
    $region58: #{downsample_forward.1} parent=5 // pred_check_branch
      %1415 = sbr.rel (%p1413) target = $region60
    $region59: #{downsample_forward.1} parent=5 // pred_region
      %s1416 = ssub.s32 %s14, 2
      // Predicated region
      $region61: #{downsample_forward.1} parent=59 // pred_check
        %p1417 = pneg %p267
      $region62: #{downsample_forward.1} parent=59 // pred_check_branch
        %1419 = sbr.rel (%p1417) target = $region64
      $region63: #{downsample_forward.1} parent=59 // pred_region
        %p1420 = scmp.lt.s32.totalorder %s25, 1
        %s1421 = scalar_select %p1420, %s25, 1
        %p1422 = scmp.lt.s32.totalorder %s26, 0
        %s1423 = scalar_select %p1422, %s26, 0
        %s1424 = smul.addr %s1423, 8
        %s1425 = smul.addr %s1421, 8
        %s1426 = sadd.s32 %s1424, %s1425
        %s1427 = smul.addr %s1426, 8
        %s1428 = scalar_lea.vmem %s8, %s1427
      $region64: #{downsample_forward.1} parent=59 // pred_fallthru
        _
    $region60: #{downsample_forward.1} parent=5 // pred_fallthru
      _
  $region6: #{downsample_forward.1} parent=0 // loop_footer
    %s18 = sadd.s32 1, %s14
  $region7: #{downsample_forward.1} parent=0 // loop_footer_branch
    %13 = sbr.rel target = $region3
  $region8: #{downsample_forward.1} parent=0 // loop_exit
    _

</llo_original>
